<compile_context>
chip_gen: v7x
topology: tpu7x:2x2x1
jax: 0.10.0
libtpu: 0.0.40
codegen_flags: <defaults>
</compile_context>

<pallas_src>
import functools

import jax
import jax.numpy as jnp
from jax.experimental import pallas as pl
from jax.experimental.pallas import tpu as pltpu


def _linear1x1_kernel(x_ref, w_ref, b_ref, o_ref, *, unroll_k):
    # x_ref: (C_in, tile)    lane-dense slab (lane dim = flattened N*H*W)
    # w_ref: (C_out, C_in)   grid-invariant
    # b_ref: (C_out, 1)      grid-invariant
    # o_ref: (C_out, tile)
    x = x_ref[...].astype(jnp.float32)
    w = w_ref[...].astype(jnp.float32)
    if unroll_k:
        # Tiny contraction: C_in unrolled VPU FMAs (outer-product accumulate);
        # keeps the MXU latency off the critical path of an overhead-bound op.
        acc = w[:, 0:1] * x[0:1, :]
        for c in range(1, x.shape[0]):
            acc = acc + w[:, c:c + 1] * x[c:c + 1, :]
    else:
        acc = jnp.dot(w, x, preferred_element_type=jnp.float32)
    o_ref[...] = (acc + b_ref[...].astype(jnp.float32)).astype(o_ref.dtype)


def _tpu_caps():
    """(vmem_capacity_bytes, has_two_tensorcores) with conservative fallbacks."""
    vmem_cap = 64 << 20  # v7x-safe lower bound
    two_cores = False
    try:
        info = pltpu.get_tpu_info()
        vmem_cap = int(getattr(info, "vmem_capacity_bytes", vmem_cap))
    except Exception:
        pass
    try:
        kind = jax.devices()[0].device_kind.lower()
        two_cores = ("v7" in kind) or ("tpu7" in kind)
    except Exception:
        pass
    return vmem_cap, two_cores


def linear_1x1(x, weight, bias, *, num_splits=None, unroll_k_max=8):
    """y = Conv2d(c_in, c_out, kernel_size=(1,1), bias=True)(x); NCHW in/out.

    x:      (N, C_in, H, W)
    weight: (C_out, C_in)   -- the (C_out, C_in, 1, 1) conv weight, squeezed
    bias:   (C_out,)
    """
    N, C_in, H, W = x.shape
    C_out = weight.shape[0]
    S = H * W
    total = N * S

    # Fold batch into the lane axis: one (C_out,C_in) x (C_in, N*S) problem.
    # Wrapper-side transpose/reshape is layout plumbing only.
    x2 = jnp.transpose(x.reshape(N, C_in, S), (1, 0, 2)).reshape(C_in, total)
    b2 = bias.reshape(C_out, 1)

    # Pad the lane axis up to a multiple of 128 -> unmasked vst on every gen.
    total_pad = ((total + 127) // 128) * 128
    if total_pad != total:
        x2 = jnp.pad(x2, ((0, 0), (0, total_pad - total)))

    vmem_cap, two_cores = _tpu_caps()
    if num_splits is None:
        num_splits = 2 if two_cores else 1  # v7x: shard across its 2 TCs
    num_splits = max(1, min(num_splits, total_pad // 128))

    # VMEM-budget-aware lane tile: biggest 128-multiple whose double-buffered
    # x-in + out tiles fit the budget.
    in_b = x2.dtype.itemsize
    out_b = x.dtype.itemsize
    bytes_per_lane = 2 * (C_in * in_b + C_out * out_b)
    budget = min(vmem_cap // 2, 32 << 20)
    tile_cap = max(128, (budget // bytes_per_lane) // 128 * 128)
    tile_s = min(tile_cap, max(128, total_pad // num_splits))
    tile_s = max(128, (tile_s // 128) * 128)
    while total_pad % tile_s:  # must evenly tile the padded slab
        tile_s -= 128
    grid = (total_pad // tile_s,)

    # Grid-invariant operands: single-buffer once large enough to matter,
    # returning that VMEM to the x/out tiles (matters most on v7x's 64 MiB).
    w_bytes = C_out * C_in * weight.dtype.itemsize
    if w_bytes >= (1 << 20):
        w_spec = pl.BlockSpec((C_out, C_in), lambda i: (0, 0),
                              pipeline_mode=pl.Buffered(1))
        b_spec = pl.BlockSpec((C_out, 1), lambda i: (0, 0),
                              pipeline_mode=pl.Buffered(1))
    else:
        w_spec = pl.BlockSpec((C_out, C_in), lambda i: (0, 0))
        b_spec = pl.BlockSpec((C_out, 1), lambda i: (0, 0))

    est = bytes_per_lane * tile_s + 4 * (w_bytes + C_out * bias.dtype.itemsize)
    vmem_limit = int(min(vmem_cap, max(2 * est, 32 << 20)))

    kernel = functools.partial(_linear1x1_kernel,
                               unroll_k=(C_in <= unroll_k_max))

    out = pl.pallas_call(
        kernel,
        out_shape=jax.ShapeDtypeStruct((C_out, total_pad), x.dtype),
        grid_spec=pltpu.PrefetchScalarGridSpec(
            num_scalar_prefetch=0,
            grid=grid,
            in_specs=[
                pl.BlockSpec((C_in, tile_s), lambda i: (0, i)),
                w_spec,
                b_spec,
            ],
            out_specs=pl.BlockSpec((C_out, tile_s), lambda i: (0, i)),
        ),
        compiler_params=pltpu.CompilerParams(
            dimension_semantics=("parallel",),
            vmem_limit_bytes=vmem_limit),
    )(x2, weight, b2)

    y2 = out[:, :total] if total_pad != total else out
    return y2.reshape(C_out, N, S).transpose(1, 0, 2).reshape(N, C_out, H, W)


# Pure-JAX reference (exactly the torch 1x1 conv semantics) for verification.
def _ref_linear_1x1(x, weight, bias):
    return jnp.einsum("oc,nchw->nohw", weight, x) + bias.reshape(1, -1, 1, 1)


if __name__ == "__main__":
    N, C_in, C_out, H, W = 2, 4, 32, 16, 16

    key = jax.random.PRNGKey(0)
    kx, kw, kb = jax.random.split(key, 3)
    # torch Conv2d default init on a 1x1 kernel reduces to
    # U(-1/sqrt(c_in), 1/sqrt(c_in)); same bound for the bias.
    bound = 1.0 / (C_in ** 0.5)
    x = jax.random.normal(kx, (N, C_in, H, W), jnp.float32)
    weight = jax.random.uniform(kw, (C_out, C_in), jnp.float32, -bound, bound)
    bias = jax.random.uniform(kb, (C_out,), jnp.float32, -bound, bound)

    out = jax.block_until_ready(linear_1x1(x, weight, bias))

    ref = _ref_linear_1x1(x, weight, bias)
    assert out.shape == (N, C_out, H, W), out.shape
    max_err = float(jnp.max(jnp.abs(out - ref)))
    assert jnp.allclose(out, ref, atol=1e-5, rtol=1e-5), max_err
    print("KERNEL_OK")
</pallas_src>

<mosaic_0001>
module attributes {stable_mosaic.version = 11 : i64} {
  func.func @_linear1x1_kernel(%arg0: i32, %arg1: memref<4x512xf32, #tpu.memory_space<vmem>>, %arg2: memref<32x4xf32, #tpu.memory_space<vmem>>, %arg3: memref<32x1xf32, #tpu.memory_space<vmem>>, %arg4: memref<32x512xf32, #tpu.memory_space<vmem>>) attributes {dimension_semantics = [#tpu.dimension_semantics<parallel>], iteration_bounds = array<i64: 1>, scalar_prefetch = 0 : i64, scratch_operands = 0 : i64, tpu.core_type = #tpu.core_type<tc>, window_params = [{transform_indices = @transform_0, window_bounds = array<i64: 4, 512>}, {pipeline_mode = #tpu.pipeline_mode<synchronous>, transform_indices = @transform_1, window_bounds = array<i64: 32, 4>}, {pipeline_mode = #tpu.pipeline_mode<synchronous>, transform_indices = @transform_2, window_bounds = array<i64: 32, 1>}, {transform_indices = @transform_3, window_bounds = array<i64: 32, 512>}]} {
    %c0 = arith.constant 0 : index
    %c0_0 = arith.constant 0 : index
    %0 = vector.load %arg1[%c0, %c0_0] : memref<4x512xf32, #tpu.memory_space<vmem>>, vector<4x512xf32>
    %c0_1 = arith.constant 0 : index
    %c0_2 = arith.constant 0 : index
    %1 = vector.load %arg2[%c0_1, %c0_2] : memref<32x4xf32, #tpu.memory_space<vmem>>, vector<32x4xf32>
    %2 = vector.extract_strided_slice %1 {offsets = [0, 0], sizes = [32, 1], strides = [1, 1]} : vector<32x4xf32> to vector<32x1xf32>
    %3 = vector.extract_strided_slice %0 {offsets = [0, 0], sizes = [1, 512], strides = [1, 1]} : vector<4x512xf32> to vector<1x512xf32>
    %4 = vector.broadcast %2 : vector<32x1xf32> to vector<32x512xf32>
    %5 = vector.broadcast %3 : vector<1x512xf32> to vector<32x512xf32>
    %6 = arith.mulf %4, %5 : vector<32x512xf32>
    %7 = vector.extract_strided_slice %1 {offsets = [0, 1], sizes = [32, 1], strides = [1, 1]} : vector<32x4xf32> to vector<32x1xf32>
    %8 = vector.extract_strided_slice %0 {offsets = [1, 0], sizes = [1, 512], strides = [1, 1]} : vector<4x512xf32> to vector<1x512xf32>
    %9 = vector.broadcast %7 : vector<32x1xf32> to vector<32x512xf32>
    %10 = vector.broadcast %8 : vector<1x512xf32> to vector<32x512xf32>
    %11 = arith.mulf %9, %10 : vector<32x512xf32>
    %12 = arith.addf %6, %11 : vector<32x512xf32>
    %13 = vector.extract_strided_slice %1 {offsets = [0, 2], sizes = [32, 1], strides = [1, 1]} : vector<32x4xf32> to vector<32x1xf32>
    %14 = vector.extract_strided_slice %0 {offsets = [2, 0], sizes = [1, 512], strides = [1, 1]} : vector<4x512xf32> to vector<1x512xf32>
    %15 = vector.broadcast %13 : vector<32x1xf32> to vector<32x512xf32>
    %16 = vector.broadcast %14 : vector<1x512xf32> to vector<32x512xf32>
    %17 = arith.mulf %15, %16 : vector<32x512xf32>
    %18 = arith.addf %12, %17 : vector<32x512xf32>
    %19 = vector.extract_strided_slice %1 {offsets = [0, 3], sizes = [32, 1], strides = [1, 1]} : vector<32x4xf32> to vector<32x1xf32>
    %20 = vector.extract_strided_slice %0 {offsets = [3, 0], sizes = [1, 512], strides = [1, 1]} : vector<4x512xf32> to vector<1x512xf32>
    %21 = vector.broadcast %19 : vector<32x1xf32> to vector<32x512xf32>
    %22 = vector.broadcast %20 : vector<1x512xf32> to vector<32x512xf32>
    %23 = arith.mulf %21, %22 : vector<32x512xf32>
    %24 = arith.addf %18, %23 : vector<32x512xf32>
    %c0_3 = arith.constant 0 : index
    %c0_4 = arith.constant 0 : index
    %25 = vector.load %arg3[%c0_3, %c0_4] : memref<32x1xf32, #tpu.memory_space<vmem>>, vector<32x1xf32>
    %26 = vector.broadcast %25 : vector<32x1xf32> to vector<32x512xf32>
    %27 = arith.addf %24, %26 : vector<32x512xf32>
    %c0_5 = arith.constant 0 : index
    %c0_6 = arith.constant 0 : index
    %28 = vector.load %arg4[%c0_5, %c0_6] : memref<32x512xf32, #tpu.memory_space<vmem>>, vector<32x512xf32>
    tpu.vector_store %arg4[%c0_5, %c0_6], %27 {strides = array<i32>} : memref<32x512xf32, #tpu.memory_space<vmem>>, vector<32x512xf32>,
    return
  }
  func.func @transform_0(%arg0: i32) -> (i32, i32) {
    %c0_i32 = arith.constant 0 : i32
    %c0_i32_0 = arith.constant 0 : i32
    return %c0_i32, %arg0 : i32, i32
  }
  func.func @transform_1(%arg0: i32) -> (i32, i32) {
    %c0_i32 = arith.constant 0 : i32
    %c0_i32_0 = arith.constant 0 : i32
    %c0_i32_1 = arith.constant 0 : i32
    return %c0_i32, %c0_i32_0 : i32, i32
  }
  func.func @transform_2(%arg0: i32) -> (i32, i32) {
    %c0_i32 = arith.constant 0 : i32
    %c0_i32_0 = arith.constant 0 : i32
    %c0_i32_1 = arith.constant 0 : i32
    return %c0_i32, %c0_i32_0 : i32, i32
  }
  func.func @transform_3(%arg0: i32) -> (i32, i32) {
    %c0_i32 = arith.constant 0 : i32
    %c0_i32_0 = arith.constant 0 : i32
    return %c0_i32, %arg0 : i32, i32
  }
}

</mosaic_0001>

<llo_original>
// kernel: tpu_custom_call.1
$region0: #{tpu_custom_call.1}
  #allocation0 [shape = 'u32[]', space=smem, size = 0x4, offset = 0x4, fixed_abs, tag = 'smem constant byte address 0x4 - core index']
  #allocation1 [shape = 'u32[144,128]{1,0:T(1,128)}', space=vmem, size = 0x12000, scoped, tag = 'internal scratch']
  %s0 = inlined_call_operand.vmem [shape: f32[4,512], index: 0, kind: input, shape index: {}]
  %s1 = inlined_call_operand.vmem [shape: f32[32,4], index: 1, kind: input, shape index: {}]
  %s2 = inlined_call_operand.vmem [shape: f32[32,1], index: 2, kind: input, shape index: {}]
  %s3 = inlined_call_operand.hbm [shape: f32[32,512], index: 3, kind: output, shape index: {}]
  %s4 = sld [smem:[#allocation0]]
  $region22: #{tpu_custom_call.1} parent=0
    _
  %s6 = ssub.s32 1, %s4
  %s7 = scalar_select 0, %s6, %s4
  $region1: #{tpu_custom_call.1} parent=0
    #allocation2 [shape = 'u8[65536]{0}', space=vmem, size = 0x10000, scoped, tag = 'output window, operand 0, single buffered']
    #allocation3 [shape = 's32[1]{0}', space=sflag, size = 0x4, scoped, tag = 'scoped memory for tpu_custom_call.1']
    %8 = vsyncpa [#allocation3], 0
    // Predicated region
    $region2: #{tpu_custom_call.1} parent=1 // pred_check
      _
    $region3: #{tpu_custom_call.1} parent=1 // pred_check_branch
      %10 = sbr.rel (0) target = $region5
    $region4: #{tpu_custom_call.1} parent=1 // pred_region
      _
    $region5: #{tpu_custom_call.1} parent=1 // pred_fallthru
      _
    // Predicated region
    $region6: #{tpu_custom_call.1} parent=1 // pred_check
      _
    $region7: #{tpu_custom_call.1} parent=1 // pred_check_branch
      %12 = sbr.rel (0) target = $region9
    $region8: #{tpu_custom_call.1} parent=1 // pred_region
      _
    $region9: #{tpu_custom_call.1} parent=1 // pred_fallthru
      _
    // Predicated region
    $region10: #{tpu_custom_call.1} parent=1 // pred_check
      _
    $region11: #{tpu_custom_call.1} parent=1 // pred_check_branch
      %14 = sbr.rel (0) target = $region13
    $region12: #{tpu_custom_call.1} parent=1 // pred_region
      _
    $region13: #{tpu_custom_call.1} parent=1 // pred_fallthru
      _
    %v15 = vld [vmem:[%s0] sm:$0xff]
    %v16 = vld [vmem:[%s0 + $0x8] sm:$0xff]
    %v17 = vld [vmem:[%s1] sm:$0xff]
    %v18 = vld [vmem:[%s1 + $0x8] sm:$0xff]
    %v19 = vld [vmem:[%s1 + $0x10] sm:$0xff]
    %v20 = vld [vmem:[%s1 + $0x18] sm:$0xff]
    %22 = vset.pattern.permute.xlu0 0
    %23 = vperm.xlu0 %22, %v17
    %v24 = vpop.permute.xlu0 %23
    %27 = vset.pattern.permute.xlu0 0
    %28 = vperm.xlu0 %27, %v18
    %v29 = vpop.permute.xlu0 %28
    %32 = vset.pattern.permute.xlu0 0
    %33 = vperm.xlu0 %32, %v19
    %v34 = vpop.permute.xlu0 %33
    %37 = vset.pattern.permute.xlu0 0
    %38 = vperm.xlu0 %37, %v20
    %v39 = vpop.permute.xlu0 %38
    %v43 = vlaneseq
    %v44 = vshrl.u32 %v43, 7
    %v45 = vsub.s32 0, %v44
    %v46 = vrot.slane %v15, %v45
    %v47 = vlaneseq
    %v48 = vshrl.u32 %v47, 7
    %v49 = vsub.s32 4, %v48
    %v50 = vrot.slane %v15, %v49
    %v51 = vlaneseq
    %v52 = vshrl.u32 %v51, 7
    %v53 = vsub.s32 0, %v52
    %v54 = vrot.slane %v16, %v53
    %v55 = vlaneseq
    %v56 = vshrl.u32 %v55, 7
    %v57 = vsub.s32 4, %v56
    %v58 = vrot.slane %v16, %v57
    %v63 = vlaneseq
    %v64 = vshrl.u32 %v63, 7
    %v65 = vsub.s32 0, %v64
    %v66 = vrot.slane %v46, %v65
    %v67 = vlaneseq
    %v68 = vshrl.u32 %v67, 7
    %v69 = vsub.s32 0, %v68
    %v70 = vrot.slane %v50, %v69
    %v71 = vlaneseq
    %v72 = vshrl.u32 %v71, 7
    %v73 = vsub.s32 0, %v72
    %v74 = vrot.slane %v54, %v73
    %v75 = vlaneseq
    %v76 = vshrl.u32 %v75, 7
    %v77 = vsub.s32 0, %v76
    %v78 = vrot.slane %v58, %v77
    %v79 = vmul.f32 %v24, %v66
    %v80 = vmul.f32 %v24, %v70
    %v81 = vmul.f32 %v24, %v74
    %v82 = vmul.f32 %v24, %v78
    %v83 = vmul.f32 %v29, %v66
    %v84 = vmul.f32 %v29, %v70
    %v85 = vmul.f32 %v29, %v74
    %v86 = vmul.f32 %v29, %v78
    %v87 = vmul.f32 %v34, %v66
    %v88 = vmul.f32 %v34, %v70
    %v89 = vmul.f32 %v34, %v74
    %v90 = vmul.f32 %v34, %v78
    %v91 = vmul.f32 %v39, %v66
    %v92 = vmul.f32 %v39, %v70
    %v93 = vmul.f32 %v39, %v74
    %v94 = vmul.f32 %v39, %v78
    %95 = vset.pattern.permute.xlu0 1
    %96 = vperm.xlu0 %95, %v17
    %v97 = vpop.permute.xlu0 %96
    %99 = vset.pattern.permute.xlu0 1
    %100 = vperm.xlu0 %99, %v18
    %v101 = vpop.permute.xlu0 %100
    %103 = vset.pattern.permute.xlu0 1
    %104 = vperm.xlu0 %103, %v19
    %v105 = vpop.permute.xlu0 %104
    %107 = vset.pattern.permute.xlu0 1
    %108 = vperm.xlu0 %107, %v20
    %v109 = vpop.permute.xlu0 %108
    %v111 = vlaneseq
    %v112 = vshrl.u32 %v111, 7
    %v113 = vsub.s32 1, %v112
    %v114 = vrot.slane %v15, %v113
    %v115 = vlaneseq
    %v116 = vshrl.u32 %v115, 7
    %v117 = vsub.s32 5, %v116
    %v118 = vrot.slane %v15, %v117
    %v119 = vlaneseq
    %v120 = vshrl.u32 %v119, 7
    %v121 = vsub.s32 1, %v120
    %v122 = vrot.slane %v16, %v121
    %v123 = vlaneseq
    %v124 = vshrl.u32 %v123, 7
    %v125 = vsub.s32 5, %v124
    %v126 = vrot.slane %v16, %v125
    %v131 = vlaneseq
    %v132 = vshrl.u32 %v131, 7
    %v133 = vsub.s32 1, %v132
    %v134 = vrot.slane %v114, %v133
    %v135 = vlaneseq
    %v136 = vshrl.u32 %v135, 7
    %v137 = vsub.s32 1, %v136
    %v138 = vrot.slane %v118, %v137
    %v139 = vlaneseq
    %v140 = vshrl.u32 %v139, 7
    %v141 = vsub.s32 1, %v140
    %v142 = vrot.slane %v122, %v141
    %v143 = vlaneseq
    %v144 = vshrl.u32 %v143, 7
    %v145 = vsub.s32 1, %v144
    %v146 = vrot.slane %v126, %v145
    %v147 = vmul.f32 %v97, %v134
    %v148 = vmul.f32 %v97, %v138
    %v149 = vmul.f32 %v97, %v142
    %v150 = vmul.f32 %v97, %v146
    %v151 = vmul.f32 %v101, %v134
    %v152 = vmul.f32 %v101, %v138
    %v153 = vmul.f32 %v101, %v142
    %v154 = vmul.f32 %v101, %v146
    %v155 = vmul.f32 %v105, %v134
    %v156 = vmul.f32 %v105, %v138
    %v157 = vmul.f32 %v105, %v142
    %v158 = vmul.f32 %v105, %v146
    %v159 = vmul.f32 %v109, %v134
    %v160 = vmul.f32 %v109, %v138
    %v161 = vmul.f32 %v109, %v142
    %v162 = vmul.f32 %v109, %v146
    %v163 = vadd.f32 %v79, %v147
    %v164 = vadd.f32 %v80, %v148
    %v165 = vadd.f32 %v81, %v149
    %v166 = vadd.f32 %v82, %v150
    %v167 = vadd.f32 %v83, %v151
    %v168 = vadd.f32 %v84, %v152
    %v169 = vadd.f32 %v85, %v153
    %v170 = vadd.f32 %v86, %v154
    %v171 = vadd.f32 %v87, %v155
    %v172 = vadd.f32 %v88, %v156
    %v173 = vadd.f32 %v89, %v157
    %v174 = vadd.f32 %v90, %v158
    %v175 = vadd.f32 %v91, %v159
    %v176 = vadd.f32 %v92, %v160
    %v177 = vadd.f32 %v93, %v161
    %v178 = vadd.f32 %v94, %v162
    %179 = vset.pattern.permute.xlu0 2
    %180 = vperm.xlu0 %179, %v17
    %v181 = vpop.permute.xlu0 %180
    %183 = vset.pattern.permute.xlu0 2
    %184 = vperm.xlu0 %183, %v18
    %v185 = vpop.permute.xlu0 %184
    %187 = vset.pattern.permute.xlu0 2
    %188 = vperm.xlu0 %187, %v19
    %v189 = vpop.permute.xlu0 %188
    %191 = vset.pattern.permute.xlu0 2
    %192 = vperm.xlu0 %191, %v20
    %v193 = vpop.permute.xlu0 %192
    %v195 = vlaneseq
    %v196 = vshrl.u32 %v195, 7
    %v197 = vsub.s32 2, %v196
    %v198 = vrot.slane %v15, %v197
    %v199 = vlaneseq
    %v200 = vshrl.u32 %v199, 7
    %v201 = vsub.s32 6, %v200
    %v202 = vrot.slane %v15, %v201
    %v203 = vlaneseq
    %v204 = vshrl.u32 %v203, 7
    %v205 = vsub.s32 2, %v204
    %v206 = vrot.slane %v16, %v205
    %v207 = vlaneseq
    %v208 = vshrl.u32 %v207, 7
    %v209 = vsub.s32 6, %v208
    %v210 = vrot.slane %v16, %v209
    %v215 = vlaneseq
    %v216 = vshrl.u32 %v215, 7
    %v217 = vsub.s32 2, %v216
    %v218 = vrot.slane %v198, %v217
    %v219 = vlaneseq
    %v220 = vshrl.u32 %v219, 7
    %v221 = vsub.s32 2, %v220
    %v222 = vrot.slane %v202, %v221
    %v223 = vlaneseq
    %v224 = vshrl.u32 %v223, 7
    %v225 = vsub.s32 2, %v224
    %v226 = vrot.slane %v206, %v225
    %v227 = vlaneseq
    %v228 = vshrl.u32 %v227, 7
    %v229 = vsub.s32 2, %v228
    %v230 = vrot.slane %v210, %v229
    %v231 = vmul.f32 %v181, %v218
    %v232 = vmul.f32 %v181, %v222
    %v233 = vmul.f32 %v181, %v226
    %v234 = vmul.f32 %v181, %v230
    %v235 = vmul.f32 %v185, %v218
    %v236 = vmul.f32 %v185, %v222
    %v237 = vmul.f32 %v185, %v226
    %v238 = vmul.f32 %v185, %v230
    %v239 = vmul.f32 %v189, %v218
    %v240 = vmul.f32 %v189, %v222
    %v241 = vmul.f32 %v189, %v226
    %v242 = vmul.f32 %v189, %v230
    %v243 = vmul.f32 %v193, %v218
    %v244 = vmul.f32 %v193, %v222
    %v245 = vmul.f32 %v193, %v226
    %v246 = vmul.f32 %v193, %v230
    %v247 = vadd.f32 %v163, %v231
    %v248 = vadd.f32 %v164, %v232
    %v249 = vadd.f32 %v165, %v233
    %v250 = vadd.f32 %v166, %v234
    %v251 = vadd.f32 %v167, %v235
    %v252 = vadd.f32 %v168, %v236
    %v253 = vadd.f32 %v169, %v237
    %v254 = vadd.f32 %v170, %v238
    %v255 = vadd.f32 %v171, %v239
    %v256 = vadd.f32 %v172, %v240
    %v257 = vadd.f32 %v173, %v241
    %v258 = vadd.f32 %v174, %v242
    %v259 = vadd.f32 %v175, %v243
    %v260 = vadd.f32 %v176, %v244
    %v261 = vadd.f32 %v177, %v245
    %v262 = vadd.f32 %v178, %v246
    %263 = vset.pattern.permute.xlu0 3
    %264 = vperm.xlu0 %263, %v17
    %v265 = vpop.permute.xlu0 %264
    %267 = vset.pattern.permute.xlu0 3
    %268 = vperm.xlu0 %267, %v18
    %v269 = vpop.permute.xlu0 %268
    %271 = vset.pattern.permute.xlu0 3
    %272 = vperm.xlu0 %271, %v19
    %v273 = vpop.permute.xlu0 %272
    %275 = vset.pattern.permute.xlu0 3
    %276 = vperm.xlu0 %275, %v20
    %v277 = vpop.permute.xlu0 %276
    %v279 = vlaneseq
    %v280 = vshrl.u32 %v279, 7
    %v281 = vsub.s32 3, %v280
    %v282 = vrot.slane %v15, %v281
    %v283 = vlaneseq
    %v284 = vshrl.u32 %v283, 7
    %v285 = vsub.s32 7, %v284
    %v286 = vrot.slane %v15, %v285
    %v287 = vlaneseq
    %v288 = vshrl.u32 %v287, 7
    %v289 = vsub.s32 3, %v288
    %v290 = vrot.slane %v16, %v289
    %v291 = vlaneseq
    %v292 = vshrl.u32 %v291, 7
    %v293 = vsub.s32 7, %v292
    %v294 = vrot.slane %v16, %v293
    %v299 = vlaneseq
    %v300 = vshrl.u32 %v299, 7
    %v301 = vsub.s32 3, %v300
    %v302 = vrot.slane %v282, %v301
    %v303 = vlaneseq
    %v304 = vshrl.u32 %v303, 7
    %v305 = vsub.s32 3, %v304
    %v306 = vrot.slane %v286, %v305
    %v307 = vlaneseq
    %v308 = vshrl.u32 %v307, 7
    %v309 = vsub.s32 3, %v308
    %v310 = vrot.slane %v290, %v309
    %v311 = vlaneseq
    %v312 = vshrl.u32 %v311, 7
    %v313 = vsub.s32 3, %v312
    %v314 = vrot.slane %v294, %v313
    %v315 = vmul.f32 %v265, %v302
    %v316 = vmul.f32 %v265, %v306
    %v317 = vmul.f32 %v265, %v310
    %v318 = vmul.f32 %v265, %v314
    %v319 = vmul.f32 %v269, %v302
    %v320 = vmul.f32 %v269, %v306
    %v321 = vmul.f32 %v269, %v310
    %v322 = vmul.f32 %v269, %v314
    %v323 = vmul.f32 %v273, %v302
    %v324 = vmul.f32 %v273, %v306
    %v325 = vmul.f32 %v273, %v310
    %v326 = vmul.f32 %v273, %v314
    %v327 = vmul.f32 %v277, %v302
    %v328 = vmul.f32 %v277, %v306
    %v329 = vmul.f32 %v277, %v310
    %v330 = vmul.f32 %v277, %v314
    %v331 = vadd.f32 %v247, %v315
    %v332 = vadd.f32 %v248, %v316
    %v333 = vadd.f32 %v249, %v317
    %v334 = vadd.f32 %v250, %v318
    %v335 = vadd.f32 %v251, %v319
    %v336 = vadd.f32 %v252, %v320
    %v337 = vadd.f32 %v253, %v321
    %v338 = vadd.f32 %v254, %v322
    %v339 = vadd.f32 %v255, %v323
    %v340 = vadd.f32 %v256, %v324
    %v341 = vadd.f32 %v257, %v325
    %v342 = vadd.f32 %v258, %v326
    %v343 = vadd.f32 %v259, %v327
    %v344 = vadd.f32 %v260, %v328
    %v345 = vadd.f32 %v261, %v329
    %v346 = vadd.f32 %v262, %v330
    %v347 = vld [vmem:[%s2] sm:$0xff]
    %v348 = vld [vmem:[%s2 + $0x8] sm:$0xff]
    %v349 = vld [vmem:[%s2 + $0x10] sm:$0xff]
    %v350 = vld [vmem:[%s2 + $0x18] sm:$0xff]
    %352 = vset.pattern.permute.xlu0 0
    %353 = vperm.xlu0 %352, %v347
    %v354 = vpop.permute.xlu0 %353
    %357 = vset.pattern.permute.xlu0 0
    %358 = vperm.xlu0 %357, %v348
    %v359 = vpop.permute.xlu0 %358
    %362 = vset.pattern.permute.xlu0 0
    %363 = vperm.xlu0 %362, %v349
    %v364 = vpop.permute.xlu0 %363
    %367 = vset.pattern.permute.xlu0 0
    %368 = vperm.xlu0 %367, %v350
    %v369 = vpop.permute.xlu0 %368
    %v371 = vadd.f32 %v331, %v354
    %v372 = vadd.f32 %v332, %v354
    %v373 = vadd.f32 %v333, %v354
    %v374 = vadd.f32 %v334, %v354
    %v375 = vadd.f32 %v335, %v359
    %v376 = vadd.f32 %v336, %v359
    %v377 = vadd.f32 %v337, %v359
    %v378 = vadd.f32 %v338, %v359
    %v379 = vadd.f32 %v339, %v364
    %v380 = vadd.f32 %v340, %v364
    %v381 = vadd.f32 %v341, %v364
    %v382 = vadd.f32 %v342, %v364
    %v383 = vadd.f32 %v343, %v369
    %v384 = vadd.f32 %v344, %v369
    %v385 = vadd.f32 %v345, %v369
    %v386 = vadd.f32 %v346, %v369
    %387 = vst [vmem:[#allocation2] sm:$0xff] %v371
    %388 = vst [vmem:[#allocation2 + $0x8] sm:$0xff] %v372
    %389 = vst [vmem:[#allocation2 + $0x10] sm:$0xff] %v373
    %390 = vst [vmem:[#allocation2 + $0x18] sm:$0xff] %v374
    %391 = vst [vmem:[#allocation2 + $0x20] sm:$0xff] %v375
    %392 = vst [vmem:[#allocation2 + $0x28] sm:$0xff] %v376
    %393 = vst [vmem:[#allocation2 + $0x30] sm:$0xff] %v377
    %394 = vst [vmem:[#allocation2 + $0x38] sm:$0xff] %v378
    %395 = vst [vmem:[#allocation2 + $0x40] sm:$0xff] %v379
    %396 = vst [vmem:[#allocation2 + $0x48] sm:$0xff] %v380
    %397 = vst [vmem:[#allocation2 + $0x50] sm:$0xff] %v381
    %398 = vst [vmem:[#allocation2 + $0x58] sm:$0xff] %v382
    %399 = vst [vmem:[#allocation2 + $0x60] sm:$0xff] %v383
    %400 = vst [vmem:[#allocation2 + $0x68] sm:$0xff] %v384
    %401 = vst [vmem:[#allocation2 + $0x70] sm:$0xff] %v385
    %402 = vst [vmem:[#allocation2 + $0x78] sm:$0xff] %v386
    // Predicated region
    $region14: #{tpu_custom_call.1} parent=1 // pred_check
      _
    $region15: #{tpu_custom_call.1} parent=1 // pred_check_branch
      %404 = sbr.rel (0) target = $region17
    $region16: #{tpu_custom_call.1} parent=1 // pred_region
      %s406 = ssub.s32 2048, 2048
      %407 = vsyncadd [#allocation3], %s406
      %s408 = sshll.u32 [#allocation2], 4
      %s409 = int_to_ptr.vmem [resolvable:$true] %s408
      %414 = dma.vmem_to_hbm [thread:$0]  %s409, 2048, %s3, [#allocation3], 512, 512, 32
    $region17: #{tpu_custom_call.1} parent=1 // pred_fallthru
      _
    // Predicated region
    $region18: #{tpu_custom_call.1} parent=1 // pred_check
      _
    $region19: #{tpu_custom_call.1} parent=1 // pred_check_branch
      %416 = sbr.rel (0) target = $region21
    $region20: #{tpu_custom_call.1} parent=1 // pred_region
      %417 = dma.done [#allocation3], 2048
    $region21: #{tpu_custom_call.1} parent=1 // pred_fallthru
      _
    %418 = vsyncpa [#allocation3], 1

</llo_original>
